<compile_context>
chip_gen: v6e
topology: v6e:2x2x1
jax: 0.10.0
libtpu: 0.0.40
codegen_flags: <defaults>
</compile_context>

<pallas_src>
import jax
import jax.numpy as jnp
from jax.experimental import pallas as pl
from jax.experimental.pallas import tpu as pltpu

DX = 128          # dimensionality of toy_x / a / y / c (lane-friendly)
X0 = 0.5          # args.x0 — deterministic init value for the toy_x parameter
_TB = 1024        # batched instances per grid step (8 sublanes x 128 lanes out)


# --------------------------------------------------------------------------
# Single-evaluation kernel: 4 separate (1, DX) VMEM inputs, SMEM scalar out.
# --------------------------------------------------------------------------
def _netx_single_kernel(x_ref, a_ref, y_ref, c_ref, o_ref):
    a = a_ref[...]                                  # (1, DX)
    d = x_ref[...] - a                              # (x - a)
    r = y_ref[...] - a - c_ref[...]                 # (y - a - c)
    # Single fused cross-lane reduction (one XLU pass).
    o_ref[0] = jnp.sum(d * d + r * r)


def _netx_loss_impl(x, a, y, c):
    dxn = x.shape[-1]
    as2d = lambda v: v.reshape(1, dxn).astype(jnp.float32)
    out = pl.pallas_call(
        _netx_single_kernel,
        out_shape=jax.ShapeDtypeStruct((1,), jnp.float32),
        in_specs=[pl.BlockSpec(memory_space=pltpu.MemorySpace.VMEM)] * 4,
        out_specs=pl.BlockSpec(memory_space=pltpu.MemorySpace.SMEM),
    )(as2d(x), as2d(a), as2d(y), as2d(c))
    return out[0]


# Differentiable wrapper: forward = Pallas kernel, backward = trivial pure JAX
# (keeps optimizer steps over toy_x inside one compiled program, no VJP through
# the custom call).
@jax.custom_vjp
def netx_loss(x, a, y, c):
    return _netx_loss_impl(x, a, y, c)


def _netx_loss_vjp_fwd(x, a, y, c):
    return _netx_loss_impl(x, a, y, c), (x, a, y, c)


def _netx_loss_vjp_bwd(res, g):
    x, a, y, c = res
    dxa = 2.0 * (x - a)               # dL/dx
    dr = 2.0 * (y - a - c)            # dL/dy
    return (g * dxa, -g * (dxa + dr), g * dr, -g * dr)


netx_loss.defvjp(_netx_loss_vjp_fwd, _netx_loss_vjp_bwd)
netx_loss_jit = jax.jit(netx_loss)


# --------------------------------------------------------------------------
# Batched kernel: B candidate x's per call; grid over B in blocks of _TB rows.
# a / y / c are shared (1, DX) rows; output is a lane-dense (8, 128) loss slab
# per grid step.
# --------------------------------------------------------------------------
def _netx_batched_kernel(x_ref, a_ref, y_ref, c_ref, o_ref):
    a = a_ref[...]                                  # (1, DX)
    r = y_ref[...] - a - c_ref[...]                 # (1, DX)
    shared = jnp.sum(r * r)                         # scalar, once per block
    d = x_ref[...] - a                              # (_TB, DX), sublane bcast
    loss = jnp.sum(d * d, axis=-1) + shared         # (_TB,)
    o_ref[...] = loss.reshape(8, 128)               # lane-dense writeback


@jax.jit
def _netx_loss_batched(x_batch, a, y, c):
    bsz, dxn = x_batch.shape
    nb = pl.cdiv(bsz, _TB)
    bp = nb * _TB
    xb = jnp.pad(x_batch.astype(jnp.float32), ((0, bp - bsz), (0, 0)))
    a2 = a.reshape(1, dxn).astype(jnp.float32)
    y2 = y.reshape(1, dxn).astype(jnp.float32)
    c2 = c.reshape(1, dxn).astype(jnp.float32)
    out = pl.pallas_call(
        _netx_batched_kernel,
        out_shape=jax.ShapeDtypeStruct((nb * 8, 128), jnp.float32),
        grid=(nb,),
        in_specs=[
            pl.BlockSpec((_TB, dxn), lambda i: (i, 0)),   # x block
            pl.BlockSpec((1, dxn), lambda i: (0, 0)),     # a (shared)
            pl.BlockSpec((1, dxn), lambda i: (0, 0)),     # y (shared)
            pl.BlockSpec((1, dxn), lambda i: (0, 0)),     # c (shared)
        ],
        out_specs=pl.BlockSpec((8, 128), lambda i: (i, 0)),
        compiler_params=pltpu.CompilerParams(
            dimension_semantics=("parallel",)),            # 2 TCs on v7x
    )(xb, a2, y2, c2)
    return out.reshape(-1)[:bsz]


class NetX:
    """JAX/Pallas port of the PyTorch Net_x module."""

    def __init__(self, dx=DX, x0=X0, a=None):
        # self.toy_x = Parameter(x0 * ones(dx))
        self.toy_x = x0 * jnp.ones((dx,), dtype=jnp.float32)
        # self.a is referenced in forward but assigned outside __init__ in the
        # original script; initialize it deterministically here.
        self.a = (jnp.zeros((dx,), dtype=jnp.float32) if a is None
                  else jnp.asarray(a, dtype=jnp.float32))

    def forward(self, y, b, c, x=None):
        del b  # unused in the reference forward pass
        xv = self.toy_x if x is None else x
        return netx_loss_jit(xv, self.a, y, c)

    def forward_batched(self, y, b, c, x_batch):
        """Evaluate the loss for a batch of candidate x's in one kernel call."""
        del b
        return _netx_loss_batched(x_batch, self.a, y, c)

    __call__ = forward


if __name__ == "__main__":
    key = jax.random.PRNGKey(0)
    ky, kc, kb, ka, kx, kxb = jax.random.split(key, 6)

    y = jax.random.normal(ky, (DX,), dtype=jnp.float32)
    c = jax.random.normal(kc, (DX,), dtype=jnp.float32)
    b = jax.random.normal(kb, (DX,), dtype=jnp.float32)   # unused, as in torch
    a = jax.random.normal(ka, (DX,), dtype=jnp.float32)
    x_explicit = jax.random.normal(kx, (DX,), dtype=jnp.float32)

    B = 2050  # exercises padding (-> 3072) and a 3-step parallel grid
    x_batch = jax.random.normal(kxb, (B, DX), dtype=jnp.float32)

    net = NetX(dx=DX, x0=X0, a=a)

    # Path 1: x is None -> uses the toy_x parameter.
    out1 = net(y, b, c)
    # Path 2: explicit x.
    out2 = net(y, b, c, x=x_explicit)
    # Batched path: B candidate x's, one kernel call.
    out_b = net.forward_batched(y, b, c, x_batch)
    # Gradient path (custom_vjp backward, pure JAX).
    g_x = jax.jit(jax.grad(netx_loss, argnums=0))(x_explicit, a, y, c)
    jax.block_until_ready((out1, out2, out_b, g_x))

    # Pure-JAX reference checks.
    shared = jnp.sum((y - a - c) ** 2)
    ref1 = jnp.sum((net.toy_x - a) ** 2) + shared
    ref2 = jnp.sum((x_explicit - a) ** 2) + shared
    ref_b = jnp.sum((x_batch - a) ** 2, axis=-1) + shared
    ref_g = 2.0 * (x_explicit - a)

    assert jnp.allclose(out1, ref1, rtol=1e-5, atol=1e-4)
    assert jnp.allclose(out2, ref2, rtol=1e-5, atol=1e-4)
    assert out_b.shape == (B,)
    assert jnp.allclose(out_b, ref_b, rtol=1e-5, atol=1e-4)
    assert jnp.allclose(g_x, ref_g, rtol=1e-5, atol=1e-5)

    print("KERNEL_OK")
</pallas_src>

<mosaic_0001>
module attributes {stable_mosaic.version = 11 : i64} {
  func.func @_netx_single_kernel(%arg0: memref<1x128xf32, #tpu.memory_space<vmem>>, %arg1: memref<1x128xf32, #tpu.memory_space<vmem>>, %arg2: memref<1x128xf32, #tpu.memory_space<vmem>>, %arg3: memref<1x128xf32, #tpu.memory_space<vmem>>, %arg4: memref<1xf32, #tpu.memory_space<smem>>) attributes {dimension_semantics = [], scalar_prefetch = 0 : i64, scratch_operands = 0 : i64, tpu.core_type = #tpu.core_type<tc>} {
    %c0 = arith.constant 0 : index
    %c0_0 = arith.constant 0 : index
    %0 = vector.load %arg1[%c0, %c0_0] : memref<1x128xf32, #tpu.memory_space<vmem>>, vector<1x128xf32>
    %c0_1 = arith.constant 0 : index
    %c0_2 = arith.constant 0 : index
    %1 = vector.load %arg0[%c0_1, %c0_2] : memref<1x128xf32, #tpu.memory_space<vmem>>, vector<1x128xf32>
    %2 = arith.subf %1, %0 : vector<1x128xf32>
    %c0_3 = arith.constant 0 : index
    %c0_4 = arith.constant 0 : index
    %3 = vector.load %arg2[%c0_3, %c0_4] : memref<1x128xf32, #tpu.memory_space<vmem>>, vector<1x128xf32>
    %4 = arith.subf %3, %0 : vector<1x128xf32>
    %c0_5 = arith.constant 0 : index
    %c0_6 = arith.constant 0 : index
    %5 = vector.load %arg3[%c0_5, %c0_6] : memref<1x128xf32, #tpu.memory_space<vmem>>, vector<1x128xf32>
    %6 = arith.subf %4, %5 : vector<1x128xf32>
    %7 = arith.mulf %2, %2 : vector<1x128xf32>
    %8 = arith.mulf %6, %6 : vector<1x128xf32>
    %9 = arith.addf %7, %8 : vector<1x128xf32>
    %10 = vector.shape_cast %9 : vector<1x128xf32> to vector<1x1x128xf32>
    %cst = arith.constant dense<0.000000e+00> : vector<1xf32>
    %11 = vector.multi_reduction <add>, %10, %cst [1, 2] : vector<1x1x128xf32> to vector<1xf32>
    %12 = vector.shape_cast %11 : vector<1xf32> to vector<1x1x1xf32>
    %13 = vector.extract %12[0, 0, 0] : f32 from vector<1x1x1xf32>
    %c0_7 = arith.constant 0 : index
    %14 = memref.load %arg4[%c0_7] : memref<1xf32, #tpu.memory_space<smem>>
    memref.store %13, %arg4[%c0_7] : memref<1xf32, #tpu.memory_space<smem>>
    return
  }
}

</mosaic_0001>

<llo_original>
// kernel: netx_loss.1
$region0: #{netx_loss.1}
  #allocation0 [shape = 'u32[]', space=smem, size = 0x4, offset = 0x4, fixed_abs, tag = 'smem constant byte address 0x4 - core index']
  #allocation1 [shape = 'u32[144,128]{1,0:T(1,128)}', space=vmem, size = 0x12000, scoped, tag = 'internal scratch']
  %s0 = inlined_call_operand.vmem [shape: f32[1,128], index: 0, kind: input, shape index: {}]
  %s1 = inlined_call_operand.vmem [shape: f32[1,128], index: 1, kind: input, shape index: {}]
  %s2 = inlined_call_operand.vmem [shape: f32[1,128], index: 2, kind: input, shape index: {}]
  %s3 = inlined_call_operand.vmem [shape: f32[1,128], index: 3, kind: input, shape index: {}]
  %s4 = inlined_call_operand.hbm [shape: f32[1], index: 4, kind: output, shape index: {}]
  %s5 = sld [smem:[#allocation0]]
  $region26: #{netx_loss.1} parent=0
    _
  %s7 = ssub.s32 1, %s5
  %s8 = scalar_select 0, %s7, %s5
  $region1: #{netx_loss.1} parent=0
    #allocation2 [shape = 'u8[512]{0}', space=smem, size = 0x200, scoped, tag = 'output window, operand 0, single buffered']
    #allocation3 [shape = 's32[1]{0}', space=sflag, size = 0x4, scoped, tag = 'scoped memory for netx_loss.1']
    %9 = vsyncpa [#allocation3], 0
    // Predicated region
    $region2: #{netx_loss.1} parent=1 // pred_check
      _
    $region3: #{netx_loss.1} parent=1 // pred_check_branch
      %11 = sbr.rel (0) target = $region5
    $region4: #{netx_loss.1} parent=1 // pred_region
      _
    $region5: #{netx_loss.1} parent=1 // pred_fallthru
      _
    // Predicated region
    $region6: #{netx_loss.1} parent=1 // pred_check
      _
    $region7: #{netx_loss.1} parent=1 // pred_check_branch
      %13 = sbr.rel (0) target = $region9
    $region8: #{netx_loss.1} parent=1 // pred_region
      _
    $region9: #{netx_loss.1} parent=1 // pred_fallthru
      _
    // Predicated region
    $region10: #{netx_loss.1} parent=1 // pred_check
      _
    $region11: #{netx_loss.1} parent=1 // pred_check_branch
      %15 = sbr.rel (0) target = $region13
    $region12: #{netx_loss.1} parent=1 // pred_region
      _
    $region13: #{netx_loss.1} parent=1 // pred_fallthru
      _
    // Predicated region
    $region14: #{netx_loss.1} parent=1 // pred_check
      _
    $region15: #{netx_loss.1} parent=1 // pred_check_branch
      %17 = sbr.rel (0) target = $region17
    $region16: #{netx_loss.1} parent=1 // pred_region
      _
    $region17: #{netx_loss.1} parent=1 // pred_fallthru
      _
    %v18 = vld [vmem:[%s1] sm:$0x1]
    %v19 = vld [vmem:[%s0] sm:$0x1]
    %v20 = vsub.f32 %v19, %v18
    %v21 = vld [vmem:[%s2] sm:$0x1]
    %v22 = vsub.f32 %v21, %v18
    %v23 = vld [vmem:[%s3] sm:$0x1]
    %v24 = vsub.f32 %v22, %v23
    %v25 = vmul.f32 %v20, %v20
    %v26 = vmul.f32 %v24, %v24
    %v27 = vadd.f32 %v25, %v26
    %vm28 = vcmask 1040384
    %v29 = vsel %vm28, %v27, 0.0
    %30 = vadd.xlane.f32.xlu0 %v29
    %v31 = vpop.xlane.xlu0 %30
    %v32 = vrot.slane %v31, 4
    %v33 = vadd.f32 %v31, %v32
    %v34 = vrot.slane %v33, 2
    %v35 = vadd.f32 %v33, %v34
    %v36 = vrot.slane %v35, 1
    %v37 = vadd.f32 %v35, %v36
    %s38 = vtos %v37
    %s39 = scalar_lea.smem [#allocation2], 0
    %40 = sst [smem:[%s39]] %s38
    // Predicated region
    $region18: #{netx_loss.1} parent=1 // pred_check
      _
    $region19: #{netx_loss.1} parent=1 // pred_check_branch
      %42 = sbr.rel (0) target = $region21
    $region20: #{netx_loss.1} parent=1 // pred_region
      %s44 = ssub.s32 16, 16
      %45 = vsyncadd [#allocation3], %s44
      %48 = dma.smem_to_hbm [#allocation2], 16, %s4, [#allocation3]
    $region21: #{netx_loss.1} parent=1 // pred_fallthru
      _
    // Predicated region
    $region22: #{netx_loss.1} parent=1 // pred_check
      _
    $region23: #{netx_loss.1} parent=1 // pred_check_branch
      %50 = sbr.rel (0) target = $region25
    $region24: #{netx_loss.1} parent=1 // pred_region
      %51 = dma.done [#allocation3], 16
    $region25: #{netx_loss.1} parent=1 // pred_fallthru
      _
    %52 = sfence
    %53 = vsyncpa [#allocation3], 1

</llo_original>
